<compile_context>
chip_gen: v5e
topology: v5e:2x2
jax: 0.10.0
libtpu: 0.0.40
codegen_flags: <defaults>
</compile_context>

<pallas_src>
import jax
import jax.numpy as jnp
from jax.experimental import pallas as pl
from jax.experimental.pallas import tpu as pltpu

# ---- module hyperparameters (synthetic, deterministic) ----------------------
INPUT_SIZE = 16
HIDDEN_SIZES = (32, 32)
ACTION_DIM = 8
MAX_ACTION = 2.0
BATCH = 8            # small demo batch; kernel is designed to scale to large B


def _round_up(x, m):
    return ((x + m - 1) // m) * m


def _choose_batch_tile(B, batch_tile):
    """Lane-aligned batch tile, amortizing grid-step overhead but keeping
    >=4 grid steps when the batch is big enough (v7x megacore sharding)."""
    assert batch_tile % 128 == 0 and batch_tile > 0
    tb = min(batch_tile, _round_up(B, 128))
    quarter = (_round_up(B, 128) // 4) // 128 * 128
    if quarter >= 128:
        tb = min(tb, quarter)
    return max(tb, 128)


def _td3_actor_kernel(x_ref, w1_ref, b1_ref, w2_ref, b2_ref, w3_ref, b3_ref,
                      o_ref):
    # x_ref : (TB, INPUT_SIZE) f32  -- natural batch-major layout
    # w*_ref: (out, in) bf16        -- nn.Linear layout, VMEM-resident
    # b*_ref: (out, 1)  f32
    # o_ref : (ACTION_DIM, TB)      -- batch on lanes (lane-dense stores)
    x = x_ref[...].astype(jnp.bfloat16)                         # (TB, IN)

    # Layer 1: ReLU(W1 @ x^T + b1) -> (H1, TB).  Contracting the feature axis
    # of both operands (A @ B^T form) puts the batch on lanes without an
    # explicit transpose materializing in the kernel.
    h1 = jax.lax.dot_general(w1_ref[...], x,
                             (((1,), (1,)), ((), ())),
                             preferred_element_type=jnp.float32)
    h1 = jnp.maximum(h1 + b1_ref[...], 0.0)

    # Layer 2: ReLU(W2 @ h1 + b2) -> (H2, TB)
    h2 = jnp.dot(w2_ref[...], h1.astype(jnp.bfloat16),
                 preferred_element_type=jnp.float32)
    h2 = jnp.maximum(h2 + b2_ref[...], 0.0)

    # Output layer: max_action * tanh(W3 @ h2 + b3) -> (A, TB)
    a = jnp.dot(w3_ref[...], h2.astype(jnp.bfloat16),
                preferred_element_type=jnp.float32)
    a = jnp.tanh(a + b3_ref[...])
    o_ref[...] = (MAX_ACTION * a).astype(o_ref.dtype)


def td3_actor_forward(state, params, *, batch_tile=16384,
                      out_dtype=jnp.float32, batch_major_output=True):
    """state: (B, INPUT_SIZE) f32; params: dict of f32 weights/biases.

    Returns (B, ACTION_DIM) actions in [-MAX_ACTION, MAX_ACTION] by default.
    For bandwidth-bound consumers pass batch_major_output=False (returns the
    lane-dense (ACTION_DIM, B) layout, no extra HBM transpose pass) and/or
    out_dtype=jnp.bfloat16 (halves output writeback).
    NOTE: pushing batch_tile past ~32768 may require
    pltpu.CompilerParams(vmem_limit_bytes=...) on v5e (16 MiB default scoped).
    """
    B = state.shape[0]
    assert state.shape[1] == INPUT_SIZE
    bf16 = jnp.bfloat16

    TB = _choose_batch_tile(B, batch_tile)
    B_pad = _round_up(B, TB)
    grid = (B_pad // TB,)

    x = state
    if B_pad != B:
        # Pad rows are zeros; columns are independent so they are simply
        # discarded below (do NOT reduce across the batch/lane dim in-kernel).
        x = jnp.pad(x, ((0, B_pad - B), (0, 0)))

    w1 = params["w1"].astype(bf16)   # (H1, IN)
    w2 = params["w2"].astype(bf16)   # (H2, H1)
    w3 = params["w3"].astype(bf16)   # (A,  H2)
    b1, b2, b3 = params["b1"], params["b2"], params["b3"]   # (out, 1) f32

    h1, h2 = HIDDEN_SIZES
    const = lambda i: (0, 0)         # weights/biases resident across batch tiles

    out_t = pl.pallas_call(
        _td3_actor_kernel,
        out_shape=jax.ShapeDtypeStruct((ACTION_DIM, B_pad), out_dtype),
        grid=grid,
        in_specs=[
            pl.BlockSpec((TB, INPUT_SIZE), lambda i: (i, 0)),   # streamed state
            pl.BlockSpec((h1, INPUT_SIZE), const),
            pl.BlockSpec((h1, 1), const),
            pl.BlockSpec((h2, h1), const),
            pl.BlockSpec((h2, 1), const),
            pl.BlockSpec((ACTION_DIM, h2), const),
            pl.BlockSpec((ACTION_DIM, 1), const),
        ],
        out_specs=pl.BlockSpec((ACTION_DIM, TB), lambda i: (0, i)),
        compiler_params=pltpu.CompilerParams(
            dimension_semantics=("parallel",)),
    )(x, w1, b1, w2, b2, w3, b3)

    out_t = out_t[:, :B]                     # drop pad columns
    if batch_major_output:
        return out_t.T                       # (B, A) -- module semantics
    return out_t                             # (A, B) -- lane-dense, no transpose


def init_params(key):
    """Deterministic init mirroring nn.Linear default (uniform +-1/sqrt(fan_in)).

    Weights in nn.Linear layout (out_features, in_features); biases (out, 1).
    All f32 (bf16 cast happens at the kernel boundary)."""
    dims = (INPUT_SIZE,) + HIDDEN_SIZES + (ACTION_DIM,)
    params = {}
    keys = jax.random.split(key, len(dims) - 1)
    for i, (fan_in, fan_out) in enumerate(zip(dims[:-1], dims[1:])):
        kw, kb = jax.random.split(keys[i])
        bound = 1.0 / jnp.sqrt(float(fan_in))
        params[f"w{i + 1}"] = jax.random.uniform(
            kw, (fan_out, fan_in), jnp.float32, -bound, bound)
        params[f"b{i + 1}"] = jax.random.uniform(
            kb, (fan_out, 1), jnp.float32, -bound, bound)
    return params


def reference_forward_f32(state, params):
    """Pure-f32 reference (matches the PyTorch module's semantics)."""
    h = jnp.maximum(state @ params["w1"].T + params["b1"].T, 0.0)
    h = jnp.maximum(h @ params["w2"].T + params["b2"].T, 0.0)
    return MAX_ACTION * jnp.tanh(h @ params["w3"].T + params["b3"].T)


def reference_forward_bf16(state, params):
    """Reference using the same bf16-operand / f32-accumulate policy as kernel."""
    bf16 = jnp.bfloat16
    x = state.astype(bf16)
    h = jnp.dot(x, params["w1"].T.astype(bf16),
                preferred_element_type=jnp.float32) + params["b1"].T
    h = jnp.maximum(h, 0.0)
    h = jnp.dot(h.astype(bf16), params["w2"].T.astype(bf16),
                preferred_element_type=jnp.float32) + params["b2"].T
    h = jnp.maximum(h, 0.0)
    a = jnp.dot(h.astype(bf16), params["w3"].T.astype(bf16),
                preferred_element_type=jnp.float32) + params["b3"].T
    return MAX_ACTION * jnp.tanh(a)


if __name__ == "__main__":
    key = jax.random.PRNGKey(0)
    k_state, k_params = jax.random.split(key)
    state = jax.random.normal(k_state, (BATCH, INPUT_SIZE), jnp.float32)
    params = init_params(k_params)

    out = td3_actor_forward(state, params)
    out = jax.block_until_ready(out)
    assert out.shape == (BATCH, ACTION_DIM)

    # Tight check vs. a reference using the same bf16 matmul policy.
    ref_bf16 = reference_forward_bf16(state, params)
    assert jnp.allclose(out, ref_bf16, atol=2e-3, rtol=2e-3), \
        "mismatch vs bf16-policy reference"

    # Loose check vs. the pure-f32 module semantics (bf16 rounding only).
    ref_f32 = reference_forward_f32(state, params)
    assert jnp.allclose(out, ref_f32, atol=5e-2, rtol=5e-2), \
        "mismatch vs f32 reference"

    print("KERNEL_OK")
</pallas_src>

<mosaic_0001>
module attributes {stable_mosaic.version = 11 : i64} {
  func.func @_td3_actor_kernel(%arg0: i32, %arg1: memref<128x16xf32, #tpu.memory_space<vmem>>, %arg2: memref<32x16xbf16, #tpu.memory_space<vmem>>, %arg3: memref<32x1xf32, #tpu.memory_space<vmem>>, %arg4: memref<32x32xbf16, #tpu.memory_space<vmem>>, %arg5: memref<32x1xf32, #tpu.memory_space<vmem>>, %arg6: memref<8x32xbf16, #tpu.memory_space<vmem>>, %arg7: memref<8x1xf32, #tpu.memory_space<vmem>>, %arg8: memref<8x128xf32, #tpu.memory_space<vmem>>) attributes {dimension_semantics = [#tpu.dimension_semantics<parallel>], iteration_bounds = array<i64: 1>, scalar_prefetch = 0 : i64, scratch_operands = 0 : i64, tpu.core_type = #tpu.core_type<tc>, window_params = [{transform_indices = @transform_0, window_bounds = array<i64: 128, 16>}, {pipeline_mode = #tpu.pipeline_mode<synchronous>, transform_indices = @transform_1, window_bounds = array<i64: 32, 16>}, {pipeline_mode = #tpu.pipeline_mode<synchronous>, transform_indices = @transform_2, window_bounds = array<i64: 32, 1>}, {pipeline_mode = #tpu.pipeline_mode<synchronous>, transform_indices = @transform_3, window_bounds = array<i64: 32, 32>}, {pipeline_mode = #tpu.pipeline_mode<synchronous>, transform_indices = @transform_4, window_bounds = array<i64: 32, 1>}, {pipeline_mode = #tpu.pipeline_mode<synchronous>, transform_indices = @transform_5, window_bounds = array<i64: 8, 32>}, {pipeline_mode = #tpu.pipeline_mode<synchronous>, transform_indices = @transform_6, window_bounds = array<i64: 8, 1>}, {transform_indices = @transform_7, window_bounds = array<i64: 8, 128>}]} {
    %c0 = arith.constant 0 : index
    %c0_0 = arith.constant 0 : index
    %0 = vector.load %arg1[%c0, %c0_0] : memref<128x16xf32, #tpu.memory_space<vmem>>, vector<128x16xf32>
    %1 = arith.truncf %0 : vector<128x16xf32> to vector<128x16xbf16>
    %c0_1 = arith.constant 0 : index
    %c0_2 = arith.constant 0 : index
    %2 = vector.load %arg2[%c0_1, %c0_2] : memref<32x16xbf16, #tpu.memory_space<vmem>>, vector<32x16xbf16>
    %cst = arith.constant dense<0.000000e+00> : vector<32x128xf32>
    %3 = tpu.matmul %2, %1, %cst {dimension_numbers = #tpu.dot_dimension_numbers<[1], [1], [0], [0], [0, 0, 1, 0], [], []>} : vector<32x16xbf16>, vector<128x16xbf16>, vector<32x128xf32> -> vector<32x128xf32>
    %c0_3 = arith.constant 0 : index
    %c0_4 = arith.constant 0 : index
    %4 = vector.load %arg3[%c0_3, %c0_4] : memref<32x1xf32, #tpu.memory_space<vmem>>, vector<32x1xf32>
    %5 = vector.broadcast %4 : vector<32x1xf32> to vector<32x128xf32>
    %6 = arith.addf %3, %5 : vector<32x128xf32>
    %cst_5 = arith.constant 0.000000e+00 : f32
    %7 = vector.broadcast %cst_5 : f32 to vector<32x128xf32>
    %8 = arith.maximumf %6, %7 : vector<32x128xf32>
    %c0_6 = arith.constant 0 : index
    %c0_7 = arith.constant 0 : index
    %9 = vector.load %arg4[%c0_6, %c0_7] : memref<32x32xbf16, #tpu.memory_space<vmem>>, vector<32x32xbf16>
    %10 = arith.truncf %8 : vector<32x128xf32> to vector<32x128xbf16>
    %cst_8 = arith.constant dense<0.000000e+00> : vector<32x128xf32>
    %11 = tpu.matmul %9, %10, %cst_8 {dimension_numbers = #tpu.dot_dimension_numbers<[1], [0], [0], [1], [0, 0, 1, 1], [], []>} : vector<32x32xbf16>, vector<32x128xbf16>, vector<32x128xf32> -> vector<32x128xf32>
    %c0_9 = arith.constant 0 : index
    %c0_10 = arith.constant 0 : index
    %12 = vector.load %arg5[%c0_9, %c0_10] : memref<32x1xf32, #tpu.memory_space<vmem>>, vector<32x1xf32>
    %13 = vector.broadcast %12 : vector<32x1xf32> to vector<32x128xf32>
    %14 = arith.addf %11, %13 : vector<32x128xf32>
    %cst_11 = arith.constant 0.000000e+00 : f32
    %15 = vector.broadcast %cst_11 : f32 to vector<32x128xf32>
    %16 = arith.maximumf %14, %15 : vector<32x128xf32>
    %c0_12 = arith.constant 0 : index
    %c0_13 = arith.constant 0 : index
    %17 = vector.load %arg6[%c0_12, %c0_13] : memref<8x32xbf16, #tpu.memory_space<vmem>>, vector<8x32xbf16>
    %18 = arith.truncf %16 : vector<32x128xf32> to vector<32x128xbf16>
    %cst_14 = arith.constant dense<0.000000e+00> : vector<8x128xf32>
    %19 = tpu.matmul %17, %18, %cst_14 {dimension_numbers = #tpu.dot_dimension_numbers<[1], [0], [0], [1], [0, 0, 1, 1], [], []>} : vector<8x32xbf16>, vector<32x128xbf16>, vector<8x128xf32> -> vector<8x128xf32>
    %c0_15 = arith.constant 0 : index
    %c0_16 = arith.constant 0 : index
    %20 = vector.load %arg7[%c0_15, %c0_16] : memref<8x1xf32, #tpu.memory_space<vmem>>, vector<8x1xf32>
    %21 = vector.broadcast %20 : vector<8x1xf32> to vector<8x128xf32>
    %22 = arith.addf %19, %21 : vector<8x128xf32>
    %23 = math.tanh %22 : vector<8x128xf32>
    %cst_17 = arith.constant 2.000000e+00 : f32
    %24 = vector.broadcast %cst_17 : f32 to vector<8x128xf32>
    %25 = arith.mulf %24, %23 : vector<8x128xf32>
    %c0_18 = arith.constant 0 : index
    %c0_19 = arith.constant 0 : index
    %26 = vector.load %arg8[%c0_18, %c0_19] : memref<8x128xf32, #tpu.memory_space<vmem>>, vector<8x128xf32>
    tpu.vector_store %arg8[%c0_18, %c0_19], %25 {strides = array<i32>} : memref<8x128xf32, #tpu.memory_space<vmem>>, vector<8x128xf32>,
    return
  }
  func.func @transform_0(%arg0: i32) -> (i32, i32) {
    %c0_i32 = arith.constant 0 : i32
    %c0_i32_0 = arith.constant 0 : i32
    return %arg0, %c0_i32 : i32, i32
  }
  func.func @transform_1(%arg0: i32) -> (i32, i32) {
    %c0_i32 = arith.constant 0 : i32
    %c0_i32_0 = arith.constant 0 : i32
    %c0_i32_1 = arith.constant 0 : i32
    return %c0_i32, %c0_i32_0 : i32, i32
  }
  func.func @transform_2(%arg0: i32) -> (i32, i32) {
    %c0_i32 = arith.constant 0 : i32
    %c0_i32_0 = arith.constant 0 : i32
    %c0_i32_1 = arith.constant 0 : i32
    return %c0_i32, %c0_i32_0 : i32, i32
  }
  func.func @transform_3(%arg0: i32) -> (i32, i32) {
    %c0_i32 = arith.constant 0 : i32
    %c0_i32_0 = arith.constant 0 : i32
    %c0_i32_1 = arith.constant 0 : i32
    return %c0_i32, %c0_i32_0 : i32, i32
  }
  func.func @transform_4(%arg0: i32) -> (i32, i32) {
    %c0_i32 = arith.constant 0 : i32
    %c0_i32_0 = arith.constant 0 : i32
    %c0_i32_1 = arith.constant 0 : i32
    return %c0_i32, %c0_i32_0 : i32, i32
  }
  func.func @transform_5(%arg0: i32) -> (i32, i32) {
    %c0_i32 = arith.constant 0 : i32
    %c0_i32_0 = arith.constant 0 : i32
    %c0_i32_1 = arith.constant 0 : i32
    return %c0_i32, %c0_i32_0 : i32, i32
  }
  func.func @transform_6(%arg0: i32) -> (i32, i32) {
    %c0_i32 = arith.constant 0 : i32
    %c0_i32_0 = arith.constant 0 : i32
    %c0_i32_1 = arith.constant 0 : i32
    return %c0_i32, %c0_i32_0 : i32, i32
  }
  func.func @transform_7(%arg0: i32) -> (i32, i32) {
    %c0_i32 = arith.constant 0 : i32
    %c0_i32_0 = arith.constant 0 : i32
    return %c0_i32, %arg0 : i32, i32
  }
}

</mosaic_0001>

<llo_original>
// kernel: tpu_custom_call.1
$region0: #{tpu_custom_call.1}
  #allocation0 [shape = 'u32[]', space=smem, size = 0x4, offset = 0x4, fixed_abs, tag = 'smem constant byte address 0x4 - core index']
  #allocation1 [shape = 'u32[72,128]{1,0:T(1,128)}', space=vmem, size = 0x9000, scoped, tag = 'internal scratch']
  %s0 = inlined_call_operand.vmem [shape: f32[128,16], index: 0, kind: input, shape index: {}]
  %s1 = inlined_call_operand.vmem [shape: bf16[32,16], index: 1, kind: input, shape index: {}]
  %s2 = inlined_call_operand.vmem [shape: f32[32,1], index: 2, kind: input, shape index: {}]
  %s3 = inlined_call_operand.vmem [shape: bf16[32,32], index: 3, kind: input, shape index: {}]
  %s4 = inlined_call_operand.vmem [shape: f32[32,1], index: 4, kind: input, shape index: {}]
  %s5 = inlined_call_operand.vmem [shape: bf16[8,32], index: 5, kind: input, shape index: {}]
  %s6 = inlined_call_operand.vmem [shape: f32[8,1], index: 6, kind: input, shape index: {}]
  %s7 = inlined_call_operand.hbm [shape: f32[8,128], index: 7, kind: output, shape index: {}]
  %s8 = sld [smem:[#allocation0]]
  $region38: #{tpu_custom_call.1} parent=0
    _
  %s10 = ssub.s32 1, %s8
  %s11 = scalar_select 0, %s10, %s8
  $region1: #{tpu_custom_call.1} parent=0
    #allocation2 [shape = 'u8[4096]{0}', space=vmem, size = 0x1000, scoped, tag = 'output window, operand 0, single buffered']
    #allocation3 [shape = 's32[1]{0}', space=sflag, size = 0x4, scoped, tag = 'scoped memory for tpu_custom_call.1']
    %12 = vsyncpa [#allocation3], 0
    // Predicated region
    $region2: #{tpu_custom_call.1} parent=1 // pred_check
      _
    $region3: #{tpu_custom_call.1} parent=1 // pred_check_branch
      %14 = sbr.rel (0) target = $region5
    $region4: #{tpu_custom_call.1} parent=1 // pred_region
      _
    $region5: #{tpu_custom_call.1} parent=1 // pred_fallthru
      _
    // Predicated region
    $region6: #{tpu_custom_call.1} parent=1 // pred_check
      _
    $region7: #{tpu_custom_call.1} parent=1 // pred_check_branch
      %16 = sbr.rel (0) target = $region9
    $region8: #{tpu_custom_call.1} parent=1 // pred_region
      _
    $region9: #{tpu_custom_call.1} parent=1 // pred_fallthru
      _
    // Predicated region
    $region10: #{tpu_custom_call.1} parent=1 // pred_check
      _
    $region11: #{tpu_custom_call.1} parent=1 // pred_check_branch
      %18 = sbr.rel (0) target = $region13
    $region12: #{tpu_custom_call.1} parent=1 // pred_region
      _
    $region13: #{tpu_custom_call.1} parent=1 // pred_fallthru
      _
    // Predicated region
    $region14: #{tpu_custom_call.1} parent=1 // pred_check
      _
    $region15: #{tpu_custom_call.1} parent=1 // pred_check_branch
      %20 = sbr.rel (0) target = $region17
    $region16: #{tpu_custom_call.1} parent=1 // pred_region
      _
    $region17: #{tpu_custom_call.1} parent=1 // pred_fallthru
      _
    // Predicated region
    $region18: #{tpu_custom_call.1} parent=1 // pred_check
      _
    $region19: #{tpu_custom_call.1} parent=1 // pred_check_branch
      %22 = sbr.rel (0) target = $region21
    $region20: #{tpu_custom_call.1} parent=1 // pred_region
      _
    $region21: #{tpu_custom_call.1} parent=1 // pred_fallthru
      _
    // Predicated region
    $region22: #{tpu_custom_call.1} parent=1 // pred_check
      _
    $region23: #{tpu_custom_call.1} parent=1 // pred_check_branch
      %24 = sbr.rel (0) target = $region25
    $region24: #{tpu_custom_call.1} parent=1 // pred_region
      _
    $region25: #{tpu_custom_call.1} parent=1 // pred_fallthru
      _
    // Predicated region
    $region26: #{tpu_custom_call.1} parent=1 // pred_check
      _
    $region27: #{tpu_custom_call.1} parent=1 // pred_check_branch
      %26 = sbr.rel (0) target = $region29
    $region28: #{tpu_custom_call.1} parent=1 // pred_region
      _
    $region29: #{tpu_custom_call.1} parent=1 // pred_fallthru
      _
    %v28 = vld [vmem:[%s0] sm:$0xff]
    %v29 = vld [vmem:[%s0 + $0x8] sm:$0xff]
    %v30 = vld [vmem:[%s0 + $0x10] sm:$0xff]
    %v31 = vld [vmem:[%s0 + $0x18] sm:$0xff]
    %v32 = vld [vmem:[%s0 + $0x20] sm:$0xff]
    %v33 = vld [vmem:[%s0 + $0x28] sm:$0xff]
    %v34 = vld [vmem:[%s0 + $0x30] sm:$0xff]
    %v35 = vld [vmem:[%s0 + $0x38] sm:$0xff]
    %v36 = vld [vmem:[%s0 + $0x40] sm:$0xff]
    %v37 = vld [vmem:[%s0 + $0x48] sm:$0xff]
    %v38 = vld [vmem:[%s0 + $0x50] sm:$0xff]
    %v39 = vld [vmem:[%s0 + $0x58] sm:$0xff]
    %v40 = vld [vmem:[%s0 + $0x60] sm:$0xff]
    %v41 = vld [vmem:[%s0 + $0x68] sm:$0xff]
    %v42 = vld [vmem:[%s0 + $0x70] sm:$0xff]
    %v43 = vld [vmem:[%s0 + $0x78] sm:$0xff]
    %v44 = vpack.c.bf16 %v29, %v28
    %v45 = vpack.c.bf16 %v31, %v30
    %v46 = vpack.c.bf16 %v33, %v32
    %v47 = vpack.c.bf16 %v35, %v34
    %v48 = vpack.c.bf16 %v37, %v36
    %v49 = vpack.c.bf16 %v39, %v38
    %v50 = vpack.c.bf16 %v41, %v40
    %v51 = vpack.c.bf16 %v43, %v42
    %v52 = vld [vmem:[%s1] sm:$0xf]
    %v53 = vld [vmem:[%s1 + $0x4] sm:$0xf]
    %v54 = vld [vmem:[%s1 + $0x8] sm:$0xf]
    %v55 = vld [vmem:[%s1 + $0xc] sm:$0xf]
    %v56 = vld [vmem:[%s2] sm:$0xff]
    %v57 = vld [vmem:[%s2 + $0x8] sm:$0xff]
    %v58 = vld [vmem:[%s2 + $0x10] sm:$0xff]
    %v59 = vld [vmem:[%s2 + $0x18] sm:$0xff]
    %61 = vset.pattern.permute.xlu0 0
    %62 = vperm.xlu0 %61, %v56
    %v63 = vpop.permute.xlu0 %62
    %66 = vset.pattern.permute.xlu0 0
    %67 = vperm.xlu0 %66, %v57
    %v68 = vpop.permute.xlu0 %67
    %71 = vset.pattern.permute.xlu0 0
    %72 = vperm.xlu0 %71, %v58
    %v73 = vpop.permute.xlu0 %72
    %76 = vset.pattern.permute.xlu0 0
    %77 = vperm.xlu0 %76, %v59
    %v78 = vpop.permute.xlu0 %77
    %v84 = vunpack.c.l.b16 %v52
    %v85 = vunpack.c.l.b16 %v53
    %v86 = vunpack.c.l.b16 %v54
    %v87 = vunpack.c.l.b16 %v55
    %v88 = vpack.c.b16 %v85, %v84
    %v89 = vpack.c.b16 %v87, %v86
    %vm90 = vcmask 130048
    %v92 = vsel %vm90, %v88, 0
    %v95 = vsel %vm90, %v89, 0
    %v98 = vsel %vm90, %v44, 0
    %v101 = vsel %vm90, %v45, 0
    %v104 = vsel %vm90, %v46, 0
    %v107 = vsel %vm90, %v47, 0
    %v110 = vsel %vm90, %v48, 0
    %v113 = vsel %vm90, %v49, 0
    %v116 = vsel %vm90, %v50, 0
    %v119 = vsel %vm90, %v51, 0
    %121 = vmatpush.bf16.xpose.msra.mxu0 %v119
    %122 = vmatpush.bf16.xpose.msra.mxu0 %v116
    %123 = vmatpush.bf16.xpose.msra.mxu0 %v113
    %124 = vmatpush.bf16.xpose.msra.mxu0 %v110
    %125 = vmatpush.bf16.xpose.msra.mxu0 %v107
    %126 = vmatpush.bf16.xpose.msra.mxu0 %v104
    %127 = vmatpush.bf16.xpose.msra.mxu0 %v101
    %128 = vmatpush.bf16.xpose.msra.mxu0 %v98
    %129 = vmatmul.bf16.gmra.mxu0 %v92
    %v130 = vpop.f32.mrf.mxu0
    %v131 = vadd.f32 %v63, %v130
    %v132 = vpop.f32.mrf.mxu0
    %v133 = vadd.f32 %v68, %v132
    %134 = vmatmul.bf16.gmra.mxu0 %v95
    %v135 = vpop.f32.mrf.mxu0
    %v136 = vadd.f32 %v73, %v135
    %v137 = vpop.f32.mrf.mxu0
    %v138 = vadd.f32 %v78, %v137
    %139 = vdwg.mxu0
    %v140 = vmax.f32 %v131, 0.0
    %v141 = vmax.f32 %v133, 0.0
    %v142 = vmax.f32 %v136, 0.0
    %v143 = vmax.f32 %v138, 0.0
    %v144 = vld [vmem:[%s3] sm:$0xf]
    %v145 = vld [vmem:[%s3 + $0x4] sm:$0xf]
    %v146 = vld [vmem:[%s3 + $0x8] sm:$0xf]
    %v147 = vld [vmem:[%s3 + $0xc] sm:$0xf]
    %v148 = vpack.c.bf16 %v141, %v140
    %v149 = vpack.c.bf16 %v143, %v142
    %v150 = vld [vmem:[%s4] sm:$0xff]
    %v151 = vld [vmem:[%s4 + $0x8] sm:$0xff]
    %v152 = vld [vmem:[%s4 + $0x10] sm:$0xff]
    %v153 = vld [vmem:[%s4 + $0x18] sm:$0xff]
    %155 = vset.pattern.permute.xlu0 0
    %156 = vperm.xlu0 %155, %v150
    %v157 = vpop.permute.xlu0 %156
    %160 = vset.pattern.permute.xlu0 0
    %161 = vperm.xlu0 %160, %v151
    %v162 = vpop.permute.xlu0 %161
    %165 = vset.pattern.permute.xlu0 0
    %166 = vperm.xlu0 %165, %v152
    %v167 = vpop.permute.xlu0 %166
    %170 = vset.pattern.permute.xlu0 0
    %171 = vperm.xlu0 %170, %v153
    %v172 = vpop.permute.xlu0 %171
    %v178 = vunpack.c.l.b16 %v144
    %v179 = vunpack.c.l.b16 %v145
    %v180 = vunpack.c.l.b16 %v146
    %v181 = vunpack.c.l.b16 %v147
    %v182 = vpack.c.b16 %v179, %v178
    %v183 = vpack.c.b16 %v181, %v180
    %vm184 = vcmask 261120
    %v186 = vsel %vm184, %v182, 0
    %v189 = vsel %vm184, %v183, 0
    %191 = vmatpush.bf16.msra.mxu0 0
    %192 = vmatpush.bf16.msra.mxu0 0
    %193 = vmatpush.bf16.msra.mxu0 0
    %194 = vmatpush.bf16.msra.mxu0 0
    %195 = vmatpush.bf16.msra.mxu0 0
    %196 = vmatpush.bf16.msra.mxu0 0
    %197 = vmatpush.bf16.msra.mxu0 %v149
    %198 = vmatpush.bf16.msra.mxu0 %v148
    %199 = vmatmul.bf16.gmra.mxu0 %v186
    %v200 = vpop.f32.mrf.mxu0
    %v201 = vadd.f32 %v157, %v200
    %v202 = vpop.f32.mrf.mxu0
    %v203 = vadd.f32 %v162, %v202
    %204 = vmatmul.bf16.gmra.mxu0 %v189
    %v205 = vpop.f32.mrf.mxu0
    %v206 = vadd.f32 %v167, %v205
    %v207 = vpop.f32.mrf.mxu0
    %v208 = vadd.f32 %v172, %v207
    %209 = vdwg.mxu0
    %v210 = vmax.f32 %v201, 0.0
    %v211 = vmax.f32 %v203, 0.0
    %v212 = vmax.f32 %v206, 0.0
    %v213 = vmax.f32 %v208, 0.0
    %v214 = vld [vmem:[%s5] sm:$0xf]
    %v215 = vpack.c.bf16 %v211, %v210
    %v216 = vpack.c.bf16 %v213, %v212
    %v217 = vld [vmem:[%s6] sm:$0xff]
    %219 = vset.pattern.permute.xlu0 0
    %220 = vperm.xlu0 %219, %v217
    %v221 = vpop.permute.xlu0 %220
    %v224 = vsel %vm184, %v214, 0
    %226 = vmatpush.bf16.msra.mxu0 0
    %227 = vmatpush.bf16.msra.mxu0 0
    %228 = vmatpush.bf16.msra.mxu0 0
    %229 = vmatpush.bf16.msra.mxu0 0
    %230 = vmatpush.bf16.msra.mxu0 0
    %231 = vmatpush.bf16.msra.mxu0 0
    %232 = vmatpush.bf16.msra.mxu0 %v216
    %233 = vmatpush.bf16.msra.mxu0 %v215
    %234 = vmatmul.bf16.gmra.mxu0 %v224
    %v235 = vpop.f32.mrf.mxu0
    %v236 = vadd.f32 %v221, %v235
    %v237 = vpop.f32.mrf.mxu0
    %238 = vdwg.mxu0
    %v239 = vtanh.pop %v236
    %v240 = vmul.f32 %v239, 2.0
    %241 = vst [vmem:[#allocation2] sm:$0xff] %v240
    // Predicated region
    $region30: #{tpu_custom_call.1} parent=1 // pred_check
      _
    $region31: #{tpu_custom_call.1} parent=1 // pred_check_branch
      %243 = sbr.rel (0) target = $region33
    $region32: #{tpu_custom_call.1} parent=1 // pred_region
      %245 = vsyncadd [#allocation3], 0
      %s247 = sshll.u32 [#allocation2], 4
      %s248 = int_to_ptr.vmem [resolvable:$true] %s247
      %s249 = sshll.u32 %s7, 4
      %s250 = int_to_ptr.hbm [resolvable:$true] %s249
      %252 = dma.vmem_to_hbm [thread:$0]  %s248, 128, %s250, [#allocation3]
    $region33: #{tpu_custom_call.1} parent=1 // pred_fallthru
      _
    // Predicated region
    $region34: #{tpu_custom_call.1} parent=1 // pred_check
      _
    $region35: #{tpu_custom_call.1} parent=1 // pred_check_branch
      %254 = sbr.rel (0) target = $region37
    $region36: #{tpu_custom_call.1} parent=1 // pred_region
      %256 = dma.done [#allocation3], 128
    $region37: #{tpu_custom_call.1} parent=1 // pred_fallthru
      _
    %257 = vsyncpa [#allocation3], 1

</llo_original>
